<compile_context>
chip_gen: v7x
topology: tpu7x:2x2x1
jax: 0.10.0
libtpu: 0.0.40
codegen_flags: <defaults>
</compile_context>

<pallas_src>
import functools

import jax
import jax.numpy as jnp
from jax.experimental import pallas as pl
from jax.experimental.pallas import tpu as pltpu


# ----------------------------------------------------------------------------
# Static geometry implied by the PyTorch module (16x16 -> upsample to 65x65).
# ----------------------------------------------------------------------------
H_IN, W_IN = 16, 16
HW_IN = H_IN * W_IN            # 256  (2 lane tiles)
H_UP, W_UP = 65, 65
HW_UP = H_UP * W_UP            # 4225
HW_UP_PAD = 4352               # 34 * 128, lane-aligned padded length

_TAPS = [(dh, dw) for dh in range(3) for dw in range(3)]


def _shift_amount(off, length, roll_like_jnp):
    """Static lane-roll amount so rolled[:, r] == x[:, r + off] (mod length)."""
    return (-off if roll_like_jnp else off) % length


# ----------------------------------------------------------------------------
# In-kernel helpers (trace-time Python; fully unrolled, 9 taps per conv).
# ----------------------------------------------------------------------------
def _window(a, off, length, mask_ref, tap, roll_like_jnp):
    """Shifted + boundary-masked copy of activation `a` along the lane axis."""
    if off == 0:
        return a                                    # centre tap: always valid
    win = pltpu.roll(a, _shift_amount(off, length, roll_like_jnp), axis=1)
    return win * mask_ref[tap:tap + 1, :]           # zero out-of-bounds taps


def _conv3x3_mxu(a, w_ref, b_ref, mask_ref, width, length, roll_like_jnp):
    """3x3 conv, channels on sublanes: acc(Co,HW) += Wk(Co,Ci) @ win(Ci,HW)."""
    cout = w_ref.shape[1]
    acc = jnp.zeros((cout, length), jnp.float32)
    for t, (dh, dw) in enumerate(_TAPS):
        off = (dh - 1) * width + (dw - 1)
        win = _window(a, off, length, mask_ref, t, roll_like_jnp)
        acc = acc + jnp.dot(w_ref[t], win, preferred_element_type=jnp.float32)
    return acc + b_ref[...]


def _conv3x3_vpu_cin1(x, w_ref, b_ref, mask_ref, width, length, roll_like_jnp):
    """3x3 conv with Cin == 1: outer-product accumulation on the VPU."""
    cout = w_ref.shape[1]
    acc = jnp.zeros((cout, length), jnp.float32)
    for t, (dh, dw) in enumerate(_TAPS):
        off = (dh - 1) * width + (dw - 1)
        win = _window(x, off, length, mask_ref, t, roll_like_jnp)
        acc = acc + w_ref[t] * win                  # (Co,1)*(1,HW) -> (Co,HW)
    return acc + b_ref[...]


def _conv3x3_vpu_cout1(a, w_ref, b_ref, mask_ref, width, length, roll_like_jnp):
    """3x3 conv with Cout == 1: VPU FMAs + one cross-sublane reduction."""
    cin = a.shape[0]
    acc = jnp.zeros((cin, length), jnp.float32)
    for t, (dh, dw) in enumerate(_TAPS):
        off = (dh - 1) * width + (dw - 1)
        win = _window(a, off, length, mask_ref, t, roll_like_jnp)
        acc = acc + w_ref[t] * win                  # (Ci,1) * (Ci,HW)
    return jnp.sum(acc, axis=0, keepdims=True) + b_ref[...]       # (1, HW)


# ----------------------------------------------------------------------------
# The fused forward kernel (one grid step == one image).
# ----------------------------------------------------------------------------
def _fused_forward_kernel(x_ref, w1_ref, b1_ref, w2_ref, b2_ref, w3_ref,
                          b3_ref, wf_ref, bf_ref, bt_ref, m16_ref, m65_ref,
                          o_ref, *, roll_like_jnp):
    x = x_ref[0]                                                  # (1, 256)
    a1 = jnp.maximum(
        _conv3x3_vpu_cin1(x, w1_ref, b1_ref, m16_ref, W_IN, HW_IN,
                          roll_like_jnp), 0.0)                    # (16, 256)
    a2 = jnp.maximum(
        _conv3x3_mxu(a1, w2_ref, b2_ref, m16_ref, W_IN, HW_IN,
                     roll_like_jnp), 0.0)                         # (32, 256)
    a3 = jnp.maximum(
        _conv3x3_mxu(a2, w3_ref, b3_ref, m16_ref, W_IN, HW_IN,
                     roll_like_jnp), 0.0)                         # (32, 256)
    # Bilinear upsample: one lane-dense MXU matmul with the (A kron A) matrix.
    up = jnp.dot(a3, bt_ref[...], preferred_element_type=jnp.float32)  # (32,4352)
    out = _conv3x3_vpu_cout1(up, wf_ref, bf_ref, m65_ref, W_UP, HW_UP_PAD,
                             roll_like_jnp)                       # (1, 4352)
    o_ref[0] = out


# ----------------------------------------------------------------------------
# Host-side constant tables (built inside jit; shape-static).
# ----------------------------------------------------------------------------
def _bilinear_matrix(in_size, out_size):
    """PyTorch Upsample(mode='bilinear', align_corners=False) weights (out,in)."""
    scale = in_size / out_size
    i = jnp.arange(out_size, dtype=jnp.float32)
    src = jnp.maximum((i + 0.5) * scale - 0.5, 0.0)
    i0 = jnp.minimum(jnp.floor(src).astype(jnp.int32), in_size - 1)
    i1 = jnp.minimum(i0 + 1, in_size - 1)
    l1 = src - i0.astype(jnp.float32)
    l0 = 1.0 - l1
    oh0 = jax.nn.one_hot(i0, in_size, dtype=jnp.float32)
    oh1 = jax.nn.one_hot(i1, in_size, dtype=jnp.float32)
    return l0[:, None] * oh0 + l1[:, None] * oh1          # (out, in)


def _upsample_matrix():
    """(256, 4352) separable bilinear matrix, zero-padded to a lane multiple."""
    a = _bilinear_matrix(H_IN, H_UP)                      # (65, 16)
    bt = jnp.einsum("oh,pw->hwop", a, a).reshape(HW_IN, HW_UP)
    return jnp.pad(bt, ((0, 0), (0, HW_UP_PAD - HW_UP))).astype(jnp.float32)


def _tap_masks(h, w, padded_len):
    """(9, padded_len) 0/1 masks: tap (dh,dw) in-bounds at each flat position."""
    hw = h * w
    y = jnp.arange(hw) // w
    x = jnp.arange(hw) % w
    rows = []
    for dh in range(3):
        for dw in range(3):
            ys, xs = y + dh - 1, x + dw - 1
            m = ((ys >= 0) & (ys < h) & (xs >= 0) & (xs < w)).astype(jnp.float32)
            if padded_len > hw:
                m = jnp.concatenate(
                    [m, jnp.zeros((padded_len - hw,), jnp.float32)])
            rows.append(m)
    return jnp.stack(rows, axis=0)


def _conv_taps(w):
    """(Cout,Cin,3,3) -> (9, Cout, Cin) per-tap matmul weights."""
    cout, cin = w.shape[0], w.shape[1]
    return jnp.transpose(w, (2, 3, 0, 1)).reshape(9, cout, cin).astype(jnp.float32)


def _conv_taps_cout1(w):
    """(1,Cin,3,3) -> (9, Cin, 1) per-tap VPU weights for conv_final."""
    cin = w.shape[1]
    return jnp.transpose(w, (2, 3, 1, 0)).reshape(9, cin, 1).astype(jnp.float32)


# ----------------------------------------------------------------------------
# pallas_call wrapper.
# ----------------------------------------------------------------------------
def make_cnn_forward(roll_like_jnp):
    kernel = functools.partial(_fused_forward_kernel,
                               roll_like_jnp=roll_like_jnp)

    def _const_spec(arr):
        nd = arr.ndim
        return pl.BlockSpec(arr.shape, lambda n, _nd=nd: (0,) * _nd)

    @jax.jit
    def forward(x_nchw, params):
        n = x_nchw.shape[0]
        x = x_nchw.astype(jnp.float32).reshape(n, 1, HW_IN)

        w1, b1 = params["conv1"]
        w2, b2 = params["conv2"]
        w3, b3 = params["conv3"]
        wf, bf = params["conv_final"]
        consts = (
            _conv_taps(w1), b1.reshape(-1, 1).astype(jnp.float32),
            _conv_taps(w2), b2.reshape(-1, 1).astype(jnp.float32),
            _conv_taps(w3), b3.reshape(-1, 1).astype(jnp.float32),
            _conv_taps_cout1(wf), bf.reshape(1, 1).astype(jnp.float32),
            _upsample_matrix(),
            _tap_masks(H_IN, W_IN, HW_IN),
            _tap_masks(H_UP, W_UP, HW_UP_PAD),
        )

        out = pl.pallas_call(
            kernel,
            out_shape=jax.ShapeDtypeStruct((n, 1, HW_UP_PAD), jnp.float32),
            grid=(n,),
            in_specs=[pl.BlockSpec((1, 1, HW_IN), lambda i: (i, 0, 0))]
                     + [_const_spec(c) for c in consts],
            out_specs=pl.BlockSpec((1, 1, HW_UP_PAD), lambda i: (i, 0, 0)),
            compiler_params=pltpu.CompilerParams(
                dimension_semantics=("parallel",),
                vmem_limit_bytes=32 << 20),
        )(x, *consts)
        return out[:, :, :HW_UP].reshape(n, 1, H_UP, W_UP)

    return forward


def _probe_roll_direction():
    """One tiny one-off kernel: does pltpu.roll match jnp.roll's direction?"""
    def probe(x_ref, o_ref):
        o_ref[...] = pltpu.roll(x_ref[...], 1, axis=1)

    x = jnp.arange(8 * 128, dtype=jnp.float32).reshape(8, 128)
    y = pl.pallas_call(
        probe, out_shape=jax.ShapeDtypeStruct((8, 128), jnp.float32))(x)
    return bool(jnp.array_equal(y, jnp.roll(x, 1, axis=1)))


# ----------------------------------------------------------------------------
# Parameters (deterministic, PyTorch-default-style uniform fan-in init).
# ----------------------------------------------------------------------------
def init_conv_params(key, cin, cout, k=3):
    wkey, bkey = jax.random.split(key)
    fan_in = cin * k * k
    bound = 1.0 / (fan_in ** 0.5)
    w = jax.random.uniform(wkey, (cout, cin, k, k), jnp.float32, -bound, bound)
    b = jax.random.uniform(bkey, (cout,), jnp.float32, -bound, bound)
    return w, b


def init_params(key):
    k1, k2, k3, k4 = jax.random.split(key, 4)
    return {
        "conv1": init_conv_params(k1, 1, 16),
        "conv2": init_conv_params(k2, 16, 32),
        "conv3": init_conv_params(k3, 32, 32),
        "conv_final": init_conv_params(k4, 32, 1),
    }


# ----------------------------------------------------------------------------
# Pure-XLA reference (lax conv + explicit bilinear matrices) for validation.
# ----------------------------------------------------------------------------
def _reference_forward(x_nchw, params):
    hp = jax.lax.Precision.HIGHEST

    def conv(x, w, b):
        y = jax.lax.conv_general_dilated(
            x, w, window_strides=(1, 1), padding=((1, 1), (1, 1)),
            dimension_numbers=("NCHW", "OIHW", "NCHW"), precision=hp)
        return y + b[None, :, None, None]

    x = x_nchw.astype(jnp.float32)
    x = jax.nn.relu(conv(x, *params["conv1"]))
    x = jax.nn.relu(conv(x, *params["conv2"]))
    x = jax.nn.relu(conv(x, *params["conv3"]))
    a = _bilinear_matrix(H_IN, H_UP)
    x = jnp.einsum("oh,pw,nchw->ncop", a, a, x, precision=hp)
    return conv(x, *params["conv_final"])


if __name__ == "__main__":
    key = jax.random.PRNGKey(0)
    pkey, xkey = jax.random.split(key)
    params = init_params(pkey)
    # conv1 expects 1 input channel -> x is (N, 1, 16, 16)
    x = jax.random.normal(xkey, (2, 1, 16, 16), dtype=jnp.float32)

    forward = make_cnn_forward(_probe_roll_direction())
    out = jax.block_until_ready(forward(x, params))

    assert out.shape == (2, 1, 65, 65), out.shape
    assert out.dtype == jnp.float32

    ref = jax.block_until_ready(_reference_forward(x, params))
    max_err = float(jnp.max(jnp.abs(out - ref)))
    assert jnp.allclose(out, ref, atol=5e-2, rtol=5e-2), max_err

    print("KERNEL_OK")
</pallas_src>

<mosaic_0001>
module attributes {stable_mosaic.version = 11 : i64} {
  func.func @probe(%arg0: memref<8x128xf32, #tpu.memory_space<vmem>>, %arg1: memref<8x128xf32, #tpu.memory_space<vmem>>) attributes {dimension_semantics = [], scalar_prefetch = 0 : i64, scratch_operands = 0 : i64, tpu.core_type = #tpu.core_type<tc>} {
    %c0 = arith.constant 0 : index
    %c0_0 = arith.constant 0 : index
    %0 = vector.load %arg0[%c0, %c0_0] : memref<8x128xf32, #tpu.memory_space<vmem>>, vector<8x128xf32>
    %c1_i32 = arith.constant 1 : i32
    %1 = tpu.dynamic_rotate %0 by %c1_i32 dim 1 : vector<8x128xf32>, i32 -> vector<8x128xf32>
    %c0_1 = arith.constant 0 : index
    %c0_2 = arith.constant 0 : index
    %2 = vector.load %arg1[%c0_1, %c0_2] : memref<8x128xf32, #tpu.memory_space<vmem>>, vector<8x128xf32>
    tpu.vector_store %arg1[%c0_1, %c0_2], %1 {strides = array<i32>} : memref<8x128xf32, #tpu.memory_space<vmem>>, vector<8x128xf32>,
    return
  }
}

</mosaic_0001>

<llo_original>
// kernel: tpu_custom_call.1
$region0: #{tpu_custom_call.1}
  #allocation0 [shape = 'u32[]', space=smem, size = 0x4, offset = 0x4, fixed_abs, tag = 'smem constant byte address 0x4 - core index']
  #allocation1 [shape = 'u32[144,128]{1,0:T(1,128)}', space=vmem, size = 0x12000, scoped, tag = 'internal scratch']
  %s0 = inlined_call_operand.hbm [shape: f32[8,128], index: 0, kind: input, shape index: {}]
  %s1 = inlined_call_operand.hbm [shape: f32[8,128], index: 1, kind: output, shape index: {}]
  %s2 = sld [smem:[#allocation0]]
  $region18: #{tpu_custom_call.1} parent=0
    _
  %s4 = ssub.s32 1, %s2
  %s5 = scalar_select 0, %s4, %s2
  $region1: #{tpu_custom_call.1} parent=0
    #allocation2 [shape = 'u8[4096]{0}', space=vmem, size = 0x1000, scoped, tag = 'input window, operand 0, single buffered']
    #allocation3 [shape = 's32[1]{0}', space=sflag, size = 0x4, scoped, tag = 'scoped memory for tpu_custom_call.1']
    #allocation4 [shape = 's32[1]{0}', space=sflag, size = 0x4, scoped, tag = 'scoped memory for tpu_custom_call.1']
    #allocation5 [shape = 'u8[4096]{0}', space=vmem, size = 0x1000, scoped, tag = 'output window, operand 0, single buffered']
    %6 = vsyncpa [#allocation3], 0
    %7 = vsyncpa [#allocation4], 0
    // Predicated region
    $region2: #{tpu_custom_call.1} parent=1 // pred_check
      _
    $region3: #{tpu_custom_call.1} parent=1 // pred_check_branch
      %9 = sbr.rel (0) target = $region5
    $region4: #{tpu_custom_call.1} parent=1 // pred_region
      %s11 = ssub.s32 128, 128
      %12 = vsyncadd [#allocation3], %s11
      %s14 = sshll.u32 [#allocation2], 4
      %s15 = int_to_ptr.vmem [resolvable:$true] %s14
      %17 = dma.hbm_to_vmem [thread:$0]  %s0, 128, %s15, [#allocation3]
    $region5: #{tpu_custom_call.1} parent=1 // pred_fallthru
      _
    // Predicated region
    $region6: #{tpu_custom_call.1} parent=1 // pred_check
      _
    $region7: #{tpu_custom_call.1} parent=1 // pred_check_branch
      %19 = sbr.rel (0) target = $region9
    $region8: #{tpu_custom_call.1} parent=1 // pred_region
      %20 = dma.done [#allocation3], 128
    $region9: #{tpu_custom_call.1} parent=1 // pred_fallthru
      _
    %v21 = vld [vmem:[#allocation2] sm:$0xff]
    %22 = vrot.lane.b32.xlu0 %v21, 1
    %v23 = vpop.permute.xlu0 %22
    %24 = vst [vmem:[#allocation5] sm:$0xff] %v23
    // Predicated region
    $region10: #{tpu_custom_call.1} parent=1 // pred_check
      _
    $region11: #{tpu_custom_call.1} parent=1 // pred_check_branch
      %26 = sbr.rel (0) target = $region13
    $region12: #{tpu_custom_call.1} parent=1 // pred_region
      %s28 = ssub.s32 128, 128
      %29 = vsyncadd [#allocation4], %s28
      %s31 = sshll.u32 [#allocation5], 4
      %s32 = int_to_ptr.vmem [resolvable:$true] %s31
      %34 = dma.vmem_to_hbm [thread:$0]  %s32, 128, %s1, [#allocation4]
    $region13: #{tpu_custom_call.1} parent=1 // pred_fallthru
      _
    // Predicated region
    $region14: #{tpu_custom_call.1} parent=1 // pred_check
      _
    $region15: #{tpu_custom_call.1} parent=1 // pred_check_branch
      %36 = sbr.rel (0) target = $region17
    $region16: #{tpu_custom_call.1} parent=1 // pred_region
      %37 = dma.done [#allocation4], 128
    $region17: #{tpu_custom_call.1} parent=1 // pred_fallthru
      _
    %38 = vsyncpa [#allocation3], 1
    %39 = vsyncpa [#allocation4], 1

</llo_original>
